<compile_context>
chip_gen: v7x
topology: tpu7x:2x2x1
jax: 0.10.0
libtpu: 0.0.40
codegen_flags: <defaults>
</compile_context>

<pallas_src>
import math

import jax
import jax.numpy as jnp
from jax import lax
from jax.experimental import pallas as pl
from jax.experimental.pallas import tpu as pltpu

_INV_SQRT2 = 1.0 / math.sqrt(2.0)
_GELU_TANH_C = math.sqrt(2.0 / math.pi)


def _physical_vmem_bytes():
    """Best-effort physical VMEM per TensorCore; conservative fallback."""
    try:
        return int(pltpu.get_tpu_info().vmem_capacity_bytes)
    except Exception:
        return 64 * 1024 * 1024  # v7x per-TC (smallest of v5e/v6e/v7x)


def _pick_tk(D, tk_max):
    """Contraction-chunk size: a 128-multiple divisor of D (no OOB lane reads),
    or the full D (no K-tiling) if none exists / D already fits."""
    if D <= tk_max:
        return D
    for cand in range(min(tk_max, D), 127, -128):
        if cand % 128 == 0 and D % cand == 0:
            return cand
    return D


def _make_kernel(alpha, tk, grid_k, approx_gelu):
    def kernel(x_ref, wt_ref, b_ref, o_ref, acc_ref):
        # x_ref : (tm, D)   full row tile (resident across the K axis)
        # wt_ref: (tk, D)   K-chunk of the (in, out)-layout weight
        # b_ref : (1, D)    bias
        # acc_ref: (tm, D)  f32 accumulator scratch
        k = pl.program_id(1)

        @pl.when(k == 0)
        def _():
            acc_ref[...] = jnp.zeros_like(acc_ref)

        if grid_k == 1:
            xk = x_ref[...]
        else:
            start = pl.multiple_of(k * tk, tk)
            xk = x_ref[:, pl.ds(start, tk)]

        # Partial matmul on the MXU, f32 accumulation (operands stay in their
        # native dtype -> fast bf16 path when the model uses bf16 weights).
        acc_ref[...] += jnp.dot(xk, wt_ref[...], preferred_element_type=jnp.float32)

        @pl.when(k == pl.num_programs(1) - 1)
        def _():
            h = acc_ref[...] + b_ref[...].astype(jnp.float32)
            xf = x_ref[...].astype(jnp.float32)

            # Per-row reductions in f32.  Algebraic simplification of the
            # reference:  ntk = sqrt(1 - cos^2) * |h| / |x|
            #                 = sqrt(s_hh*s_xx - s_hx^2) / s_xx
            # max(.,0) removes the 1 - cos^2 < 0 NaN hazard; eps keeps
            # all-zero rows finite.
            s_hh = jnp.sum(h * h, axis=-1, keepdims=True)
            s_xx = jnp.sum(xf * xf, axis=-1, keepdims=True)
            s_hx = jnp.sum(h * xf, axis=-1, keepdims=True)
            num = jnp.maximum(s_hh * s_xx - s_hx * s_hx, 0.0)

            # EUP reciprocal + one Newton step -> f32-accurate, no VALU divide.
            d = s_xx + 1e-30
            inv = pl.reciprocal(d, approx=True)
            inv = inv * (2.0 - d * inv)
            ntk = jnp.sqrt(num) * inv

            z = ntk * h
            if approx_gelu:
                # tanh-approx GELU: runs on the EUP slot, lighter on the VALU
                # (v6e/v7x).  NOTE: no longer bit-matches nn.GELU() exact erf.
                g = 0.5 * z * (1.0 + jnp.tanh(_GELU_TANH_C * (z + 0.044715 * z * z * z)))
            else:
                # exact GELU (PyTorch nn.GELU default, erf formulation)
                g = 0.5 * z * (1.0 + lax.erf(z * _INV_SQRT2))

            o_ref[...] = (xf + alpha * g).astype(o_ref.dtype)

    return kernel


def dynamic_ntk_layer(x, weight_t, bias, alpha, *, tm=256, tk=512, approx_gelu=False):
    """Forward pass of DynamicNTKLayer.

    x        : (batch, seq, hidden)
    weight_t : (hidden, hidden) nn.Linear weight PRE-TRANSPOSED to (in, out)
               layout (transpose once at init, not per call).
    bias     : (hidden,)
    alpha    : python float (config.ntk_alpha)
    tm, tk   : row tile / contraction-chunk size (auto-clamped to fit VMEM).
    """
    batch, seq, hidden = x.shape
    M = batch * seq
    D = hidden

    phys_vmem = _physical_vmem_bytes()
    vmem_cap = int(phys_vmem * 0.85)  # leave headroom for the compiler

    tk_eff = _pick_tk(D, tk)
    grid_k = D // tk_eff

    # Row tile: clamp to M; if everything fits in one step, split into >= 2
    # steps so both v7x TensorCores get work on the "parallel" row axis.
    tm_eff = min(tm, M)
    if tm_eff == M and M > 8:
        half = (M // 2 + 7) // 8 * 8
        if 0 < half < M:
            tm_eff = half

    x_it = x.dtype.itemsize
    w_it = weight_t.dtype.itemsize
    b_it = bias.dtype.itemsize

    def vmem_estimate(tm_, tk_):
        return (
            2 * tm_ * D * x_it        # double-buffered input row tiles
            + 2 * tm_ * D * x_it      # double-buffered output tiles
            + 2 * tk_ * D * w_it      # double-buffered weight K-chunks
            + 2 * D * b_it            # bias
            + tm_ * D * 4             # f32 accumulator scratch
            + 4 * tm_ * D * 4         # f32 epilogue temporaries (h, xf, z, gelu)
        )

    # Shrink the row tile if the working set would not fit physical VMEM
    # (prevents spill-bound behaviour on v7x's 64 MiB for large hidden).
    while tm_eff > 64 and vmem_estimate(tm_eff, tk_eff) > int(phys_vmem * 0.8):
        tm_eff = max(64, (tm_eff // 2) // 8 * 8)

    grid_m = pl.cdiv(M, tm_eff)

    x2d = x.reshape(M, D)
    b2d = bias.reshape(1, D)

    vmem_limit = int(min(vmem_cap, max(2 * vmem_estimate(tm_eff, tk_eff), 32 * 1024 * 1024)))

    cost = pl.CostEstimate(
        flops=2 * M * D * D + 12 * M * D,
        transcendentals=M * D,  # erf/tanh is elementwise on (M, D)
        bytes_accessed=(
            x2d.size * x_it
            + weight_t.size * w_it
            + bias.size * b_it
            + M * D * x_it
        ),
    )

    out2d = pl.pallas_call(
        _make_kernel(float(alpha), tk_eff, grid_k, approx_gelu),
        out_shape=jax.ShapeDtypeStruct((M, D), x.dtype),
        grid_spec=pltpu.PrefetchScalarGridSpec(
            num_scalar_prefetch=0,
            grid=(grid_m, grid_k),
            in_specs=[
                pl.BlockSpec((tm_eff, D), lambda i, k: (i, 0)),   # x rows, resident over k
                pl.BlockSpec((tk_eff, D), lambda i, k: (k, 0)),   # weight K-chunk
                pl.BlockSpec((1, D), lambda i, k: (0, 0)),        # bias
            ],
            out_specs=pl.BlockSpec((tm_eff, D), lambda i, k: (i, 0)),
            scratch_shapes=[pltpu.VMEM((tm_eff, D), jnp.float32)],
        ),
        compiler_params=pltpu.CompilerParams(
            dimension_semantics=("parallel", "arbitrary"),
            vmem_limit_bytes=vmem_limit,
        ),
        cost_estimate=cost,
    )(x2d, weight_t, b2d)

    return out2d.reshape(batch, seq, hidden)


def _reference(x, weight, bias, alpha):
    h = jnp.einsum("bsd,od->bso", x, weight) + bias
    h_norm = jnp.linalg.norm(h, axis=-1, keepdims=True)
    x_norm = jnp.linalg.norm(x, axis=-1, keepdims=True)
    cos = jnp.sum(h * x, axis=-1, keepdims=True) / (h_norm * x_norm)
    ntk = jnp.sqrt(1.0 - cos ** 2) * h_norm / x_norm
    z = ntk * h
    gelu = 0.5 * z * (1.0 + lax.erf(z / math.sqrt(2.0)))
    return x + alpha * gelu


if __name__ == "__main__":
    batch, seq, hidden = 2, 8, 32
    alpha = 1.5

    key = jax.random.PRNGKey(0)
    kx, kw, kb = jax.random.split(key, 3)

    x = jax.random.normal(kx, (batch, seq, hidden), dtype=jnp.float32)
    # nn.Linear params: weight (out, in), bias (out,)
    bound = 1.0 / math.sqrt(hidden)
    weight = jax.random.uniform(kw, (hidden, hidden), jnp.float32, -bound, bound)
    bias = jax.random.uniform(kb, (hidden,), jnp.float32, -bound, bound)

    # Pre-transpose the weight ONCE (init-time), as the kernel expects (in, out).
    weight_t = jnp.asarray(weight.T)

    out = dynamic_ntk_layer(x, weight_t, bias, alpha)
    out = jax.block_until_ready(out)

    ref = _reference(x, weight, bias, alpha)
    assert out.shape == (batch, seq, hidden)
    assert jnp.allclose(out, ref, atol=1e-4, rtol=1e-4)

    print("KERNEL_OK")
</pallas_src>

<mosaic_0001>
module attributes {stable_mosaic.version = 11 : i64} {
  func.func @kernel(%arg0: i32, %arg1: i32, %arg2: memref<8x32xf32, #tpu.memory_space<vmem>>, %arg3: memref<32x32xf32, #tpu.memory_space<vmem>>, %arg4: memref<1x32xf32, #tpu.memory_space<vmem>>, %arg5: memref<8x32xf32, #tpu.memory_space<vmem>>, %arg6: memref<8x32xf32, #tpu.memory_space<vmem>>) attributes {dimension_semantics = [#tpu.dimension_semantics<parallel>, #tpu.dimension_semantics<arbitrary>], iteration_bounds = array<i64: 2, 1>, scalar_prefetch = 0 : i64, scratch_operands = 1 : i64, tpu.core_type = #tpu.core_type<tc>, window_params = [{transform_indices = @transform_0, window_bounds = array<i64: 8, 32>}, {transform_indices = @transform_1, window_bounds = array<i64: 32, 32>}, {pipeline_mode = #tpu.pipeline_mode<synchronous>, transform_indices = @transform_2, window_bounds = array<i64: 1, 32>}, {transform_indices = @transform_3, window_bounds = array<i64: 8, 32>}]} {
    %c0_i32 = arith.constant 0 : i32
    %0 = arith.cmpi eq, %arg1, %c0_i32 : i32
    %1 = arith.extui %0 : i1 to i32
    %c0_i32_0 = arith.constant 0 : i32
    %2 = arith.cmpi ne, %1, %c0_i32_0 : i32
    scf.if %2 {
      %cst_10 = arith.constant 0.000000e+00 : f32
      %12 = vector.broadcast %cst_10 : f32 to vector<8x32xf32>
      %c0_11 = arith.constant 0 : index
      %c0_12 = arith.constant 0 : index
      %13 = vector.load %arg6[%c0_11, %c0_12] : memref<8x32xf32, #tpu.memory_space<vmem>>, vector<8x32xf32>
      tpu.vector_store %arg6[%c0_11, %c0_12], %12 {strides = array<i32>} : memref<8x32xf32, #tpu.memory_space<vmem>>, vector<8x32xf32>,
    } else {
    }
    %c0 = arith.constant 0 : index
    %c0_1 = arith.constant 0 : index
    %3 = vector.load %arg2[%c0, %c0_1] : memref<8x32xf32, #tpu.memory_space<vmem>>, vector<8x32xf32>
    %c0_2 = arith.constant 0 : index
    %c0_3 = arith.constant 0 : index
    %4 = vector.load %arg6[%c0_2, %c0_3] : memref<8x32xf32, #tpu.memory_space<vmem>>, vector<8x32xf32>
    %c0_4 = arith.constant 0 : index
    %c0_5 = arith.constant 0 : index
    %5 = vector.load %arg3[%c0_4, %c0_5] : memref<32x32xf32, #tpu.memory_space<vmem>>, vector<32x32xf32>
    %cst = arith.constant dense<0.000000e+00> : vector<8x32xf32>
    %6 = tpu.matmul %3, %5, %cst {dimension_numbers = #tpu.dot_dimension_numbers<[1], [0], [0], [1], [0, 0, 1, 1], [], []>} : vector<8x32xf32>, vector<32x32xf32>, vector<8x32xf32> -> vector<8x32xf32>
    %7 = arith.addf %4, %6 : vector<8x32xf32>
    %c0_6 = arith.constant 0 : index
    %c0_7 = arith.constant 0 : index
    %8 = vector.load %arg6[%c0_6, %c0_7] : memref<8x32xf32, #tpu.memory_space<vmem>>, vector<8x32xf32>
    tpu.vector_store %arg6[%c0_6, %c0_7], %7 {strides = array<i32>} : memref<8x32xf32, #tpu.memory_space<vmem>>, vector<8x32xf32>,
    %c0_i32_8 = arith.constant 0 : i32
    %9 = arith.cmpi eq, %arg1, %c0_i32_8 : i32
    %10 = arith.extui %9 : i1 to i32
    %c0_i32_9 = arith.constant 0 : i32
    %11 = arith.cmpi ne, %10, %c0_i32_9 : i32
    scf.if %11 {
      %c0_10 = arith.constant 0 : index
      %c0_11 = arith.constant 0 : index
      %12 = vector.load %arg6[%c0_10, %c0_11] : memref<8x32xf32, #tpu.memory_space<vmem>>, vector<8x32xf32>
      %c0_12 = arith.constant 0 : index
      %c0_13 = arith.constant 0 : index
      %13 = vector.load %arg4[%c0_12, %c0_13] : memref<1x32xf32, #tpu.memory_space<vmem>>, vector<1x32xf32>
      %14 = vector.broadcast %13 : vector<1x32xf32> to vector<8x32xf32>
      %15 = arith.addf %12, %14 : vector<8x32xf32>
      %c0_14 = arith.constant 0 : index
      %c0_15 = arith.constant 0 : index
      %16 = vector.load %arg2[%c0_14, %c0_15] : memref<8x32xf32, #tpu.memory_space<vmem>>, vector<8x32xf32>
      %17 = arith.mulf %15, %15 : vector<8x32xf32>
      %cst_16 = arith.constant dense<0.000000e+00> : vector<8xf32>
      %18 = vector.multi_reduction <add>, %17, %cst_16 [1] : vector<8x32xf32> to vector<8xf32>
      %19 = vector.shape_cast %18 : vector<8xf32> to vector<8x1xf32>
      %20 = arith.mulf %16, %16 : vector<8x32xf32>
      %cst_17 = arith.constant dense<0.000000e+00> : vector<8xf32>
      %21 = vector.multi_reduction <add>, %20, %cst_17 [1] : vector<8x32xf32> to vector<8xf32>
      %22 = vector.shape_cast %21 : vector<8xf32> to vector<8x1xf32>
      %23 = arith.mulf %15, %16 : vector<8x32xf32>
      %cst_18 = arith.constant dense<0.000000e+00> : vector<8xf32>
      %24 = vector.multi_reduction <add>, %23, %cst_18 [1] : vector<8x32xf32> to vector<8xf32>
      %25 = vector.shape_cast %24 : vector<8xf32> to vector<8x1xf32>
      %26 = arith.mulf %19, %22 : vector<8x1xf32>
      %27 = arith.mulf %25, %25 : vector<8x1xf32>
      %28 = arith.subf %26, %27 : vector<8x1xf32>
      %cst_19 = arith.constant 0.000000e+00 : f32
      %29 = vector.broadcast %cst_19 : f32 to vector<8x1xf32>
      %30 = arith.maximumf %28, %29 : vector<8x1xf32>
      %cst_20 = arith.constant 1.000000e-30 : f32
      %31 = vector.broadcast %cst_20 : f32 to vector<8x1xf32>
      %32 = arith.addf %22, %31 : vector<8x1xf32>
      %33 = tpu.reciprocal %32 {approx = true} : vector<8x1xf32> -> vector<8x1xf32>
      %34 = arith.mulf %32, %33 : vector<8x1xf32>
      %cst_21 = arith.constant 2.000000e+00 : f32
      %35 = vector.broadcast %cst_21 : f32 to vector<8x1xf32>
      %36 = arith.subf %35, %34 : vector<8x1xf32>
      %37 = arith.mulf %33, %36 : vector<8x1xf32>
      %38 = math.sqrt %30 : vector<8x1xf32>
      %39 = arith.mulf %38, %37 : vector<8x1xf32>
      %40 = vector.broadcast %39 : vector<8x1xf32> to vector<8x32xf32>
      %41 = arith.mulf %40, %15 : vector<8x32xf32>
      %cst_22 = arith.constant 5.000000e-01 : f32
      %42 = vector.broadcast %cst_22 : f32 to vector<8x32xf32>
      %43 = arith.mulf %42, %41 : vector<8x32xf32>
      %cst_23 = arith.constant 0.707106769 : f32
      %44 = vector.broadcast %cst_23 : f32 to vector<8x32xf32>
      %45 = arith.mulf %41, %44 : vector<8x32xf32>
      %46 = math.erf %45 : vector<8x32xf32>
      %cst_24 = arith.constant 1.000000e+00 : f32
      %47 = vector.broadcast %cst_24 : f32 to vector<8x32xf32>
      %48 = arith.addf %47, %46 : vector<8x32xf32>
      %49 = arith.mulf %43, %48 : vector<8x32xf32>
      %cst_25 = arith.constant 1.500000e+00 : f32
      %50 = vector.broadcast %cst_25 : f32 to vector<8x32xf32>
      %51 = arith.mulf %50, %49 : vector<8x32xf32>
      %52 = arith.addf %16, %51 : vector<8x32xf32>
      %c0_26 = arith.constant 0 : index
      %c0_27 = arith.constant 0 : index
      %53 = vector.load %arg5[%c0_26, %c0_27] : memref<8x32xf32, #tpu.memory_space<vmem>>, vector<8x32xf32>
      tpu.vector_store %arg5[%c0_26, %c0_27], %52 {strides = array<i32>} : memref<8x32xf32, #tpu.memory_space<vmem>>, vector<8x32xf32>,
    } else {
    }
    return
  }
  func.func @transform_0(%arg0: i32, %arg1: i32) -> (i32, i32) {
    %c0_i32 = arith.constant 0 : i32
    %c0_i32_0 = arith.constant 0 : i32
    return %arg0, %c0_i32 : i32, i32
  }
  func.func @transform_1(%arg0: i32, %arg1: i32) -> (i32, i32) {
    %c0_i32 = arith.constant 0 : i32
    %c0_i32_0 = arith.constant 0 : i32
    return %arg1, %c0_i32 : i32, i32
  }
  func.func @transform_2(%arg0: i32, %arg1: i32) -> (i32, i32) {
    %c0_i32 = arith.constant 0 : i32
    %c0_i32_0 = arith.constant 0 : i32
    %c0_i32_1 = arith.constant 0 : i32
    return %c0_i32, %c0_i32_0 : i32, i32
  }
  func.func @transform_3(%arg0: i32, %arg1: i32) -> (i32, i32) {
    %c0_i32 = arith.constant 0 : i32
    %c0_i32_0 = arith.constant 0 : i32
    return %arg0, %c0_i32 : i32, i32
  }
}

</mosaic_0001>

<llo_original>
// kernel: tpu_custom_call.1
$region0: #{tpu_custom_call.1}
  #allocation0 [shape = 'u32[]', space=smem, size = 0x4, offset = 0x4, fixed_abs, tag = 'smem constant byte address 0x4 - core index']
  #allocation1 [shape = 'u32[144,128]{1,0:T(1,128)}', space=vmem, size = 0x12000, scoped, tag = 'internal scratch']
  #allocation2 [shape = 'f32[8,32]{1,0:T(8,128)}', space=vmem, size = 0x1000, scoped, tag = 'scratch operand']
  %s0 = inlined_call_operand.hbm [shape: f32[16,32], index: 0, kind: input, shape index: {}]
  %s1 = inlined_call_operand.hbm [shape: f32[32,32], index: 1, kind: input, shape index: {}]
  %s2 = inlined_call_operand.vmem [shape: f32[1,32], index: 2, kind: input, shape index: {}]
  %s3 = inlined_call_operand.hbm [shape: f32[16,32], index: 3, kind: output, shape index: {}]
  %s4 = sld [smem:[#allocation0]]
  $region61: #{tpu_custom_call.1} parent=0
    _
  %s6 = ssub.s32 1, %s4
  %s7 = scalar_select 0, %s6, %s4
  $region1: #{tpu_custom_call.1} parent=0
    #allocation3 [shape = 'u8[8192]{0}', space=vmem, size = 0x2000, scoped, tag = 'input window, operand 0']
    #allocation4 [shape = 's32[2]{0}', space=sflag, size = 0x8, scoped, tag = 'scoped memory for tpu_custom_call.1']
    #allocation5 [shape = 's32[2]{0}', space=sflag, size = 0x8, scoped, tag = 'scoped memory for tpu_custom_call.1']
    #allocation6 [shape = 'u8[16384]{0}', space=vmem, size = 0x4000, scoped, tag = 'input window, operand 1, single buffered']
    #allocation7 [shape = 's32[1]{0}', space=sflag, size = 0x4, scoped, tag = 'scoped memory for tpu_custom_call.1']
    #allocation8 [shape = 'u8[8192]{0}', space=vmem, size = 0x2000, scoped, tag = 'output window, operand 0']
    %8 = vsyncpa [#allocation4], 0
    %s9 = scalar_lea.sflag [#allocation4], 1
    %10 = vsyncpa %s9, 0
    %11 = vsyncpa [#allocation7], 0
    %12 = vsyncpa [#allocation5], 0
    %s13 = scalar_lea.sflag [#allocation5], 1
    %14 = vsyncpa %s13, 0
    loop: start=0, step=1, limit=4
    $region2: #{tpu_custom_call.1} parent=1 // loop_pre_header
      _
    $region3: #{tpu_custom_call.1} parent=1 // loop_header
      %s16 = sphi 0, %s20
      %p17 = scmp.ge.s32.totalorder %s16, 4
      %s23 = sphi 0, %s35
      %s24 = sphi 0, %s31
      %s25 = sphi 0, %s23
      %s26 = sphi 0, %s24
      %s27 = sphi 0, %s25
      %s28 = sphi 0, %s26
      %s38 = sphi 0, %s40
      %s41 = sphi 0, %s38
      %s42 = sphi 0, %s41
      %s58 = sphi 0, %s42
      %s64 = sphi 0, %s66
      %s67 = sphi 0, %s64
      %s68 = sphi 0, %s67
      %s84 = sphi 0, %s68
      %s88 = sphi 0, %s88
      %s90 = sphi 0, %s88
      %s91 = sphi 0, %s90
      %s105 = sphi 0, %s91
      %s111 = sphi 0, %s113
      %s114 = sphi 0, %s111
      %s115 = sphi 0, %s114
      %s131 = sphi 0, %s115
    $region4: #{tpu_custom_call.1} parent=1 // loop_header_branch
      %19 = sbr.rel (%p17) target = $region8
    $region5: #{tpu_custom_call.1} parent=1 // loop_body
      %s21 = ssub.s32 %s16, 1
      %s22 = ssub.s32 %s16, 2
      %s29 = sadd.s32 1, %s24
      %p30 = scmp.ge.s32.totalorder %s29, 1
      %s31 = scalar_select %p30, 0, %s29
      %s32 = sadd.s32 1, %s23
      %s33 = scalar_select %p30, %s32, %s23
      %p34 = scmp.ge.s32.totalorder %s33, 2
      %s35 = scalar_select %p34, 0, %s33
      %s36 = ssub.s32 %s23, %s35
      %p37 = scmp.eq.s32.totalorder %s36, 0
      %s39 = sadd.s32 %s38, 1
      %s40 = scalar_select %p37, %s38, %s39
      %p43 = pneg %p37
      %p44 = scmp.eq.s32.totalorder %s16, 1
      %p45 = por %p43, %p44
      %p46 = scmp.ne.s32.totalorder %s38, %s41
      %p47 = scmp.eq.s32.totalorder %s16, 0
      %p48 = por %p46, %p47
      %p49 = scmp.ne.s32.totalorder %s38, %s41
      %p50 = scmp.eq.s32.totalorder %s21, 1
      %p51 = por %p49, %p50
      %p52 = scmp.ne.s32.totalorder %s41, %s42
      %p53 = scmp.eq.s32.totalorder %s21, 0
      %p54 = por %p52, %p53
      %p55 = scmp.ne.s32.totalorder %s41, %s42
      %p56 = scmp.eq.s32.totalorder %s22, 1
      %p57 = por %p55, %p56
      %p59 = scmp.ne.s32.totalorder %s42, %s58
      %p60 = scmp.eq.s32.totalorder %s22, 0
      %p61 = por %p59, %p60
      %s62 = ssub.s32 %s24, %s31
      %p63 = scmp.eq.s32.totalorder %s62, 0
      %s65 = sadd.s32 %s64, 1
      %s66 = scalar_select %p63, %s64, %s65
      %p69 = pneg %p63
      %p70 = scmp.eq.s32.totalorder %s16, 1
      %p71 = por %p69, %p70
      %p72 = scmp.ne.s32.totalorder %s64, %s67
      %p73 = scmp.eq.s32.totalorder %s16, 0
      %p74 = por %p72, %p73
      %p75 = scmp.ne.s32.totalorder %s64, %s67
      %p76 = scmp.eq.s32.totalorder %s21, 1
      %p77 = por %p75, %p76
      %p78 = scmp.ne.s32.totalorder %s67, %s68
      %p79 = scmp.eq.s32.totalorder %s21, 0
      %p80 = por %p78, %p79
      %p81 = scmp.ne.s32.totalorder %s67, %s68
      %p82 = scmp.eq.s32.totalorder %s22, 1
      %p83 = por %p81, %p82
      %p85 = scmp.ne.s32.totalorder %s68, %s84
      %p86 = scmp.eq.s32.totalorder %s22, 0
      %p87 = por %p85, %p86
      %s89 = sadd.s32 %s88, 1
      %p92 = scmp.eq.s32.totalorder %s16, 1
      %p93 = scmp.ne.s32.totalorder %s88, %s90
      %p94 = scmp.eq.s32.totalorder %s16, 0
      %p95 = por %p93, %p94
      %p96 = scmp.ne.s32.totalorder %s88, %s90
      %p97 = scmp.eq.s32.totalorder %s21, 1
      %p98 = por %p96, %p97
      %p99 = scmp.ne.s32.totalorder %s90, %s91
      %p100 = scmp.eq.s32.totalorder %s21, 0
      %p101 = por %p99, %p100
      %p102 = scmp.ne.s32.totalorder %s90, %s91
      %p103 = scmp.eq.s32.totalorder %s22, 1
      %p104 = por %p102, %p103
      %p106 = scmp.ne.s32.totalorder %s91, %s105
      %p107 = scmp.eq.s32.totalorder %s22, 0
      %p108 = por %p106, %p107
      %s109 = ssub.s32 %s23, %s35
      %p110 = scmp.eq.s32.totalorder %s109, 0
      %s112 = sadd.s32 %s111, 1
      %s113 = scalar_select %p110, %s111, %s112
      %p116 = pneg %p110
      %p117 = scmp.eq.s32.totalorder %s16, 1
      %p118 = por %p116, %p117
      %p119 = scmp.ne.s32.totalorder %s111, %s114
      %p120 = scmp.eq.s32.totalorder %s16, 0
      %p121 = por %p119, %p120
      %p122 = scmp.ne.s32.totalorder %s111, %s114
      %p123 = scmp.eq.s32.totalorder %s21, 1
      %p124 = por %p122, %p123
      %p125 = scmp.ne.s32.totalorder %s114, %s115
      %p126 = scmp.eq.s32.totalorder %s21, 0
      %p127 = por %p125, %p126
      %p128 = scmp.ne.s32.totalorder %s114, %s115
      %p129 = scmp.eq.s32.totalorder %s22, 1
      %p130 = por %p128, %p129
      %p132 = scmp.ne.s32.totalorder %s115, %s131
      %p133 = scmp.eq.s32.totalorder %s22, 0
      %p134 = por %p132, %p133
      %p135 = scmp.le.s32.totalorder 1, %s16
      %p136 = scmp.lt.s32.totalorder %s16, 3
      %p137 = pnand %p135, %p136
      %p138 = pneg %p137
      // Predicated region
      $region9: #{tpu_custom_call.1} parent=5 // pred_check
        _
      $region10: #{tpu_custom_call.1} parent=5 // pred_check_branch
        %140 = sbr.rel (%p137) target = $region12
      $region11: #{tpu_custom_call.1} parent=5 // pred_region
        %s141 = ssub.s32 %s16, 1
        // Predicated region
        $region13: #{tpu_custom_call.1} parent=11 // pred_check
          %p142 = pneg %p80
        $region14: #{tpu_custom_call.1} parent=11 // pred_check_branch
          %144 = sbr.rel (%p142) target = $region16
        $region15: #{tpu_custom_call.1} parent=11 // pred_region
          %s145 = smul.u32 4, %s26
          %s147 = ssub.s32 512, 512
          %148 = vsyncadd [#allocation7], %s147
          %s149 = smul.addr %s145, 128
          %s150 = scalar_lea.hbm %s1, %s149
          %s151 = sshll.u32 [#allocation6], 4
          %s152 = int_to_ptr.vmem [resolvable:$true] %s151
          %157 = dma.hbm_to_vmem [thread:$0]  %s150, 512, %s152, [#allocation7], 128, 128, 8
        $region16: #{tpu_custom_call.1} parent=11 // pred_fallthru
          _
        // Predicated region
        $region17: #{tpu_custom_call.1} parent=11 // pred_check
          %p158 = pneg %p101
        $region18: #{tpu_custom_call.1} parent=11 // pred_check_branch
          %160 = sbr.rel (%p158) target = $region20
        $region19: #{tpu_custom_call.1} parent=11 // pred_region
          _
        $region20: #{tpu_custom_call.1} parent=11 // pred_fallthru
          _
      $region12: #{tpu_custom_call.1} parent=5 // pred_fallthru
        _
      %p161 = scmp.lt.s32.totalorder %s16, 2
      // Predicated region
      $region21: #{tpu_custom_call.1} parent=5 // pred_check
        %p162 = pneg %p161
      $region22: #{tpu_custom_call.1} parent=5 // pred_check_branch
        %164 = sbr.rel (%p162) target = $region24
      $region23: #{tpu_custom_call.1} parent=5 // pred_region
        // Predicated region
        $region25: #{tpu_custom_call.1} parent=23 // pred_check
          %p165 = pneg %p48
        $region26: #{tpu_custom_call.1} parent=23 // pred_check_branch
          %167 = sbr.rel (%p165) target = $region28
        $region27: #{tpu_custom_call.1} parent=23 // pred_region
          %s168 = sand.u32 %s38, 1
          %s169 = scalar_lea.sflag [#allocation4], %s168
          %s170 = sand.u32 %s38, 1
          %s171 = smul.addr %s170, 8
          %s172 = scalar_lea.vmem [#allocation3], %s171
          %s174 = ssub.s32 128, 128
          %175 = vsyncadd %s169, %s174
          %s176 = smul.addr %s23, 128
          %s177 = scalar_lea.hbm %s0, %s176
          %s179 = sshll.u32 %s172, 4
          %s180 = int_to_ptr.vmem [resolvable:$true] %s179
          %182 = dma.hbm_to_vmem [thread:$0]  %s177, 128, %s180, %s169
        $region28: #{tpu_custom_call.1} parent=23 // pred_fallthru
          _
      $region24: #{tpu_custom_call.1} parent=5 // pred_fallthru
        _
      %p183 = scmp.le.s32.totalorder 1, %s16
      %p184 = scmp.lt.s32.totalorder %s16, 3
      %p185 = pnand %p183, %p184
      %p186 = pneg %p185
      // Predicated region
      $region29: #{tpu_custom_call.1} parent=5 // pred_check
        _
      $region30: #{tpu_custom_call.1} parent=5 // pred_check_branch
        %188 = sbr.rel (%p185) target = $region32
      $region31: #{tpu_custom_call.1} parent=5 // pred_region
        %s189 = ssub.s32 %s16, 1
        %s190 = sand.u32 %s41, 1
        %s191 = scalar_lea.sflag [#allocation4], %s190
        %s192 = sand.u32 %s41, 1
        %s193 = smul.addr %s192, 8
        %s194 = scalar_lea.vmem [#allocation3], %s193
        // Predicated region
        $region33: #{tpu_custom_call.1} parent=31 // pred_check
          %p195 = pneg %p54
        $region34: #{tpu_custom_call.1} parent=31 // pred_check_branch
          %197 = sbr.rel (%p195) target = $region36
        $region35: #{tpu_custom_call.1} parent=31 // pred_region
          %198 = dma.done %s191, 128
        $region36: #{tpu_custom_call.1} parent=31 // pred_fallthru
          _
        // Predicated region
        $region37: #{tpu_custom_call.1} parent=31 // pred_check
          %p199 = pneg %p80
        $region38: #{tpu_custom_call.1} parent=31 // pred_check_branch
          %201 = sbr.rel (%p199) target = $region40
        $region39: #{tpu_custom_call.1} parent=31 // pred_region
          %202 = dma.done [#allocation7], 512
        $region40: #{tpu_custom_call.1} parent=31 // pred_fallthru
          _
        %s203 = sand.u32 %s41, 1
        %s204 = scalar_lea.sflag [#allocation4], %s203
        %s205 = sand.u32 %s41, 1
        %s206 = smul.addr %s205, 8
        %s207 = scalar_lea.vmem [#allocation3], %s206
        %p208 = pneg %p54
        %p209 = pneg %p51
        %p210 = pneg %p80
        %p211 = pneg %p77
        %p212 = pneg %p101
        %p213 = pneg %p98
        %p214 = pneg %p127
        %p215 = pneg %p124
        %s216 = sand.u32 %s114, 1
        %s217 = scalar_lea.sflag [#allocation5], %s216
        %s218 = sand.u32 %s114, 1
        %s219 = smul.addr %s218, 8
        %s220 = scalar_lea.vmem [#allocation8], %s219
        %s221 = smul.u32 4, %s26
        %p222 = scmp.eq.s32.totalorder %s26, 0
        // Predicated region
        $region41: #{tpu_custom_call.1} parent=31 // pred_check
          %p223 = pneg %p222
        $region42: #{tpu_custom_call.1} parent=31 // pred_check_branch
          %225 = sbr.rel (%p223) target = $region44
        $region43: #{tpu_custom_call.1} parent=31 // pred_region
          %vm226 = vcmask 261120
          %227 = vst.msk [vmem:[#allocation2] sm:$0xff] %vm226, 0.0
        $region44: #{tpu_custom_call.1} parent=31 // pred_fallthru
          _
        %v228 = vld [vmem:[%s194] sm:$0xff]
        %v229 = vld [vmem:[#allocation2] sm:$0xff]
        %v230 = vld [vmem:[#allocation6] sm:$0xff]
        %v231 = vld [vmem:[#allocation6 + $0x8] sm:$0xff]
        %v232 = vld [vmem:[#allocation6 + $0x10] sm:$0xff]
        %v233 = vld [vmem:[#allocation6 + $0x18] sm:$0xff]
        %vm234 = vcmask 261120
        %v236 = vsel %vm234, %v228, 0
        %238 = vmatprep.subr.mxu0 0.0
        %239 = vmatpush1.msra.mxu0 %v230
        %240 = vmatprep.subr.mxu0 0.0
        %241 = vmatpush1.msra.mxu0 %v231
        %242 = vmatprep.subr.mxu0 0.0
        %243 = vmatpush1.msra.mxu0 %v232
        %244 = vmatprep.subr.mxu0 0.0
        %245 = vmatpush1.msra.mxu0 %v233
        %246 = vmatprep.subr.mxu0 0.0
        %247 = vmatpush1.msra.mxu0 0.0
        %248 = vmatprep.subr.mxu0 0.0
        %249 = vmatpush1.msra.mxu0 0.0
        %250 = vmatprep.subr.mxu0 0.0
        %251 = vmatpush1.msra.mxu0 0.0
        %252 = vmatprep.subr.mxu0 0.0
        %253 = vmatpush1.msra.mxu0 0.0
        %254 = vmatprep.subr.mxu0 0.0
        %255 = vmatpush1.msra.mxu0 0.0
        %256 = vmatprep.subr.mxu0 0.0
        %257 = vmatpush1.msra.mxu0 0.0
        %258 = vmatprep.subr.mxu0 0.0
        %259 = vmatpush1.msra.mxu0 0.0
        %260 = vmatprep.subr.mxu0 0.0
        %261 = vmatpush1.msra.mxu0 0.0
        %262 = vmatprep.subr.mxu0 0.0
        %263 = vmatpush1.msra.mxu0 0.0
        %264 = vmatprep.subr.mxu0 0.0
        %265 = vmatpush1.msra.mxu0 0.0
        %266 = vmatprep.subr.mxu0 0.0
        %267 = vmatpush1.msra.mxu0 0.0
        %268 = vmatprep.subr.mxu0 0.0
        %269 = vmatpush1.msra.mxu0 0.0
        %270 = vmatprep.subr.mxu0 0.0
        %271 = vmatpush1.msra.mxu0 0.0
        %272 = vmatprep.subr.mxu0 0.0
        %273 = vmatpush1.msra.mxu0 0.0
        %274 = vmatprep.subr.mxu0 0.0
        %275 = vmatpush1.msra.mxu0 0.0
        %276 = vmatprep.subr.mxu0 0.0
        %277 = vmatpush1.msra.mxu0 0.0
        %278 = vmatprep.subr.mxu0 0.0
        %279 = vmatpush1.msra.mxu0 0.0
        %280 = vmatprep.subr.mxu0 0.0
        %281 = vmatpush1.msra.mxu0 0.0
        %282 = vmatprep.subr.mxu0 0.0
        %283 = vmatpush1.msra.mxu0 0.0
        %284 = vmatprep.subr.mxu0 0.0
        %285 = vmatpush1.msra.mxu0 0.0
        %286 = vmatprep.subr.mxu0 0.0
        %287 = vmatpush1.msra.mxu0 0.0
        %288 = vmatprep.subr.mxu0 0.0
        %289 = vmatpush1.msra.mxu0 0.0
        %290 = vmatprep.subr.mxu0 0.0
        %291 = vmatpush1.msra.mxu0 0.0
        %292 = vmatprep.subr.mxu0 0.0
        %293 = vmatpush1.msra.mxu0 0.0
        %294 = vmatprep.subr.mxu0 0.0
        %295 = vmatpush1.msra.mxu0 0.0
        %296 = vmatprep.subr.mxu0 0.0
        %297 = vmatpush1.msra.mxu0 0.0
        %298 = vmatprep.subr.mxu0 0.0
        %299 = vmatpush1.msra.mxu0 0.0
        %300 = vmatprep.subr.mxu0 0.0
        %301 = vmatpush1.msra.mxu0 0.0
        %302 = vmatprep.mubr.f32.mxu0 0.0
        %303 = vmatmul.mubr.f32.gmra.mrb[0].mxu0 %v236
        %v304 = vpop.f32.mrb[0].mxu0
        %v305 = vadd.f32 0.0, %v304
        %v306 = vpop.f32.mrb[0].mxu0
        %307 = vdwg.mxu0
        %v308 = vadd.f32 %v229, %v305
        %309 = vst.msk [vmem:[#allocation2] sm:$0xff] %vm234, %v308
        // Predicated region
        $region45: #{tpu_custom_call.1} parent=31 // pred_check
          %p310 = pneg %p222
        $region46: #{tpu_custom_call.1} parent=31 // pred_check_branch
          %312 = sbr.rel (%p310) target = $region48
        $region47: #{tpu_custom_call.1} parent=31 // pred_region
          %v313 = vld [vmem:[#allocation2] sm:$0xff]
          %v314 = vld [vmem:[%s2] sm:$0x1]
          %v316 = vlaneseq
          %v317 = vshrl.u32 %v316, 7
          %v318 = vsub.s32 0, %v317
          %v319 = vrot.slane %v314, %v318
          %v321 = vadd.f32 %v313, %v319
          %v322 = vld [vmem:[%s194] sm:$0xff]
          %v323 = vmul.f32 %v321, %v321
          %v324 = vsel %vm234, %v323, 0.0
          %325 = vadd.xlane.f32.xlu0 %v324
          %v326 = vpop.xlane.xlu0 %325
          %v327 = vmul.f32 %v322, %v322
          %v328 = vsel %vm234, %v327, 0.0
          %329 = vadd.xlane.f32.xlu0 %v328
          %v330 = vpop.xlane.xlu0 %329
          %v331 = vmul.f32 %v321, %v322
          %v332 = vsel %vm234, %v331, 0.0
          %333 = vadd.xlane.f32.xlu0 %v332
          %v334 = vpop.xlane.xlu0 %333
          %v335 = vmul.f32 %v326, %v330
          %v336 = vmul.f32 %v334, %v334
          %v337 = vsub.f32 %v335, %v336
          %v338 = vmax.f32 %v337, 0.0
          %v339 = vadd.f32 %v330, 1e-30
          %v340 = vrcp.pop %v339
          %v341 = vmul.f32 %v339, %v340
          %v342 = vsub.f32 2.0, %v341
          %v343 = vmul.f32 %v340, %v342
          %v344 = vrsqrt.pop %v338
          %v345 = vmul.f32 %v338, %v344
          %vm346 = vcmp.eq.f32.partialorder %v338, inf
          %v347 = vsel %vm346, %v338, %v345
          %vm348 = vcmp.eq.f32.partialorder %v338, 0.0
          %v349 = vand.u32 %v338, 2147483648
          %v350 = vsel %vm348, %v349, %v347
          %v351 = vmul.f32 %v350, %v343
          %v352 = vmul.f32 %v351, %v321
          %v353 = vmul.f32 %v352, 0.5
          %v354 = vmul.f32 %v352, 0.70710677
          %v355 = verf.f32.pop %v354
          %v356 = vadd.f32 %v355, 1.0
          %v357 = vmul.f32 %v353, %v356
          %v358 = vmul.f32 %v357, 1.5
          %v359 = vadd.f32 %v322, %v358
          %360 = vst.msk [vmem:[%s220] sm:$0xff] %vm234, %v359
        $region48: #{tpu_custom_call.1} parent=31 // pred_fallthru
          _
        %s361 = sand.u32 %s114, 1
        %s362 = scalar_lea.sflag [#allocation5], %s361
        %s363 = sand.u32 %s114, 1
        %s364 = smul.addr %s363, 8
        %s365 = scalar_lea.vmem [#allocation8], %s364
        // Predicated region
        $region49: #{tpu_custom_call.1} parent=31 // pred_check
          %p366 = pneg %p124
        $region50: #{tpu_custom_call.1} parent=31 // pred_check_branch
          %368 = sbr.rel (%p366) target = $region52
        $region51: #{tpu_custom_call.1} parent=31 // pred_region
          %s370 = ssub.s32 128, 128
          %371 = vsyncadd %s362, %s370
          %s372 = smul.addr %s25, 128
          %s373 = scalar_lea.hbm %s3, %s372
          %s375 = sshll.u32 %s365, 4
          %s376 = int_to_ptr.vmem [resolvable:$true] %s375
          %378 = dma.vmem_to_hbm [thread:$0]  %s376, 128, %s373, %s362
        $region52: #{tpu_custom_call.1} parent=31 // pred_fallthru
          _
      $region32: #{tpu_custom_call.1} parent=5 // pred_fallthru
        _
      %p379 = scmp.le.s32.totalorder 2, %s16
      // Predicated region
      $region53: #{tpu_custom_call.1} parent=5 // pred_check
        %p380 = pneg %p379
      $region54: #{tpu_custom_call.1} parent=5 // pred_check_branch
        %382 = sbr.rel (%p380) target = $region56
      $region55: #{tpu_custom_call.1} parent=5 // pred_region
        %s383 = ssub.s32 %s16, 2
        // Predicated region
        $region57: #{tpu_custom_call.1} parent=55 // pred_check
          %p384 = pneg %p130
        $region58: #{tpu_custom_call.1} parent=55 // pred_check_branch
          %386 = sbr.rel (%p384) target = $region60
        $region59: #{tpu_custom_call.1} parent=55 // pred_region
          %s387 = sand.u32 %s115, 1
          %s388 = scalar_lea.sflag [#allocation5], %s387
          %s389 = sand.u32 %s115, 1
          %s390 = smul.addr %s389, 8
          %s391 = scalar_lea.vmem [#allocation8], %s390
          %392 = dma.done %s388, 128
        $region60: #{tpu_custom_call.1} parent=55 // pred_fallthru
          _
      $region56: #{tpu_custom_call.1} parent=5 // pred_fallthru
        _
    $region6: #{tpu_custom_call.1} parent=1 // loop_footer
      %s20 = sadd.s32 1, %s16
    $region7: #{tpu_custom_call.1} parent=1 // loop_footer_branch
      %15 = sbr.rel target = $region3
    $region8: #{tpu_custom_call.1} parent=1 // loop_exit
      _
    %393 = vsyncpa [#allocation4], 1
    %s394 = scalar_lea.sflag [#allocation4], 1
    %395 = vsyncpa %s394, 1
    %396 = vsyncpa [#allocation7], 1
    %397 = vsyncpa [#allocation5], 1
    %s398 = scalar_lea.sflag [#allocation5], 1
    %399 = vsyncpa %s398, 1

</llo_original>
